<compile_context>
chip_gen: v5e
topology: v5e:2x2
jax: 0.10.0
libtpu: 0.0.40
codegen_flags: <defaults>
</compile_context>

<pallas_src>
import functools
import math

import jax
import jax.numpy as jnp
from jax.experimental import pallas as pl
from jax.experimental.pallas import tpu as pltpu

# Conservative for v7x (64 MiB physical); footprint of all kernels below is << this.
_VMEM_LIMIT = 32 * 1024 * 1024


def _celu(x):
    # torch.nn.CELU (alpha=1): max(0, x) + min(0, exp(x) - 1)
    return jnp.where(x > 0, x, jnp.expm1(x))


# --------------------------------------------------------------------------- #
# s = x @ W  (row-tiled, bf16 in / bf16 out, f32 MXU accumulation)
# --------------------------------------------------------------------------- #
def _xw_kernel(x_ref, w_ref, o_ref):
    o_ref[...] = jnp.dot(x_ref[...], w_ref[...],
                         preferred_element_type=jnp.float32).astype(o_ref.dtype)


def _xw(x_bf16, w_bf16, *, tm):
    n, din = x_bf16.shape
    dout = w_bf16.shape[1]
    return pl.pallas_call(
        _xw_kernel,
        out_shape=jax.ShapeDtypeStruct((n, dout), jnp.bfloat16),
        grid=(n // tm,),
        in_specs=[
            pl.BlockSpec((tm, din), lambda i: (i, 0)),
            pl.BlockSpec((din, dout), lambda i: (0, 0)),   # full (small) weight
        ],
        out_specs=pl.BlockSpec((tm, dout), lambda i: (i, 0)),
        compiler_params=pltpu.CompilerParams(
            dimension_semantics=("parallel",),
            vmem_limit_bytes=_VMEM_LIMIT),
    )(x_bf16, w_bf16)


# --------------------------------------------------------------------------- #
# GCN layer:  celu(adj @ s),  grid = (row tiles, k tiles), f32 VMEM accumulator
# --------------------------------------------------------------------------- #
def _adj_s_kernel(adj_ref, s_ref, o_ref, acc_ref):
    @pl.when(pl.program_id(1) == 0)
    def _():
        acc_ref[...] = jnp.zeros(acc_ref.shape, jnp.float32)

    acc_ref[...] += jnp.dot(adj_ref[...], s_ref[...],
                            preferred_element_type=jnp.float32)

    @pl.when(pl.program_id(1) == pl.num_programs(1) - 1)
    def _():
        o_ref[...] = _celu(acc_ref[...]).astype(o_ref.dtype)


def _gcn_layer(adj_bf16, x_bf16, w_bf16, *, tm, tk):
    n = x_bf16.shape[0]
    dout = w_bf16.shape[1]
    # Precompute s = x @ W once (instead of per row tile).
    s = _xw(x_bf16, w_bf16, tm=tm)                       # (n, dout) bf16
    return pl.pallas_call(
        _adj_s_kernel,
        out_shape=jax.ShapeDtypeStruct((n, dout), jnp.bfloat16),
        grid=(n // tm, n // tk),
        in_specs=[
            pl.BlockSpec((tm, tk), lambda i, k: (i, k)),     # adj tile (bf16)
            pl.BlockSpec((tk, dout), lambda i, k: (k, 0)),   # s rows for this k tile
        ],
        out_specs=pl.BlockSpec((tm, dout), lambda i, k: (i, 0)),
        scratch_shapes=[pltpu.VMEM((tm, dout), jnp.float32)],
        compiler_params=pltpu.CompilerParams(
            dimension_semantics=("parallel", "arbitrary"),
            vmem_limit_bytes=_VMEM_LIMIT),
    )(adj_bf16, s)


# --------------------------------------------------------------------------- #
# Fused Q/K/V/skip projection: one lane-dense (Dg, 4*HC) matmul per row tile.
# Q/K/V are emitted as lane-dense (N, H*C) bf16 slabs; skip (x_r) stays f32.
# --------------------------------------------------------------------------- #
def _proj_kernel(x_ref, w_ref, b_ref, q_ref, k_ref, v_ref, xr_ref, *, hc):
    proj = jnp.dot(x_ref[...], w_ref[...],
                   preferred_element_type=jnp.float32) + b_ref[...]   # (tm, 4*HC) f32
    q_ref[...] = proj[:, 0 * hc:1 * hc].astype(q_ref.dtype)
    k_ref[...] = proj[:, 1 * hc:2 * hc].astype(k_ref.dtype)
    v_ref[...] = proj[:, 2 * hc:3 * hc].astype(v_ref.dtype)
    xr_ref[...] = proj[:, 3 * hc:4 * hc]


def _qkv_proj(x_bf16, w_fused_bf16, b_fused, *, hc, tm):
    n, dg = x_bf16.shape
    slab = pl.BlockSpec((tm, hc), lambda i: (i, 0))
    return pl.pallas_call(
        functools.partial(_proj_kernel, hc=hc),
        out_shape=(
            jax.ShapeDtypeStruct((n, hc), jnp.bfloat16),   # q (carries 1/sqrt(C))
            jax.ShapeDtypeStruct((n, hc), jnp.bfloat16),   # k
            jax.ShapeDtypeStruct((n, hc), jnp.bfloat16),   # v
            jax.ShapeDtypeStruct((n, hc), jnp.float32),    # skip (x_r)
        ),
        grid=(n // tm,),
        in_specs=[
            pl.BlockSpec((tm, dg), lambda i: (i, 0)),
            pl.BlockSpec((dg, 4 * hc), lambda i: (0, 0)),
            pl.BlockSpec((1, 4 * hc), lambda i: (0, 0)),
        ],
        out_specs=(slab, slab, slab, slab),
        compiler_params=pltpu.CompilerParams(
            dimension_semantics=("parallel",),
            vmem_limit_bytes=_VMEM_LIMIT),
    )(x_bf16, w_fused_bf16, b_fused)


# --------------------------------------------------------------------------- #
# Attention (flash-style online softmax over kv tiles) + skip + LayerNorm + CELU
# Q/K/V tiles are lane-dense (tile, H*C); heads are split by in-vreg lane slicing.
# --------------------------------------------------------------------------- #
def _attn_kernel(q_ref, k_ref, v_ref, xr_ref, gamma_ref, beta_ref, o_ref,
                 m_scr, l_scr, acc_scr, *, heads, c, eps):
    kv = pl.program_id(1)

    @pl.when(kv == 0)
    def _():
        m_scr[...] = jnp.full(m_scr.shape, -jnp.inf, jnp.float32)
        l_scr[...] = jnp.zeros(l_scr.shape, jnp.float32)
        acc_scr[...] = jnp.zeros(acc_scr.shape, jnp.float32)

    q = q_ref[...]            # (tm, H*C) bf16, pre-scaled by 1/sqrt(C)
    k = k_ref[...]            # (tk, H*C) bf16
    v = v_ref[...]            # (tk, H*C) bf16
    acc_prev = acc_scr[...]   # (tm, H*C) f32

    parts = []
    for h in range(heads):                     # unrolled; heads is small & static
        sl = slice(h * c, (h + 1) * c)
        s = jnp.einsum("tc,sc->ts", q[:, sl], k[:, sl],
                       preferred_element_type=jnp.float32)         # (tm, tk) f32
        m_prev = m_scr[h]
        m_new = jnp.maximum(m_prev, jnp.max(s, axis=-1, keepdims=True))
        alpha = jnp.exp(m_prev - m_new)
        # NOTE: if the EUP slot saturates on v6e/v7x, exp can be computed in bf16.
        p = jnp.exp(s - m_new)
        l_scr[h] = alpha * l_scr[h] + jnp.sum(p, axis=-1, keepdims=True)
        m_scr[h] = m_new
        parts.append(alpha * acc_prev[:, sl] +
                     jnp.dot(p.astype(jnp.bfloat16), v[:, sl],
                             preferred_element_type=jnp.float32))
    acc_scr[...] = jnp.concatenate(parts, axis=-1)

    @pl.when(kv == pl.num_programs(1) - 1)
    def _():
        acc = acc_scr[...]                                           # (tm, H*C)
        out = jnp.concatenate(
            [acc[:, h * c:(h + 1) * c] * pl.reciprocal(l_scr[h], approx=True)
             for h in range(heads)], axis=-1) + xr_ref[...]
        # torch-style LayerNorm: gamma*(x-mean)/(std+eps)+beta, Bessel-corrected std.
        # Exact divide here (runs once per row tile, off the kv critical path).
        d = out.shape[-1]
        mean = jnp.mean(out, axis=-1, keepdims=True)
        cen = out - mean
        var = jnp.sum(cen * cen, axis=-1, keepdims=True) * (1.0 / (d - 1))
        normed = gamma_ref[...] * cen / (jnp.sqrt(var) + eps) + beta_ref[...]
        o_ref[...] = _celu(normed).astype(o_ref.dtype)


def _attention(q, k, v, xr, gamma, beta, *, heads, c, eps, tm, tk):
    n, hc = q.shape
    kernel = functools.partial(_attn_kernel, heads=heads, c=c, eps=eps)
    return pl.pallas_call(
        kernel,
        out_shape=jax.ShapeDtypeStruct((n, hc), jnp.float32),
        grid=(n // tm, n // tk),
        in_specs=[
            pl.BlockSpec((tm, hc), lambda i, kv: (i, 0)),    # q (fixed over kv)
            pl.BlockSpec((tk, hc), lambda i, kv: (kv, 0)),   # k
            pl.BlockSpec((tk, hc), lambda i, kv: (kv, 0)),   # v
            pl.BlockSpec((tm, hc), lambda i, kv: (i, 0)),    # skip x_r
            pl.BlockSpec((1, hc), lambda i, kv: (0, 0)),     # gamma
            pl.BlockSpec((1, hc), lambda i, kv: (0, 0)),     # beta
        ],
        out_specs=pl.BlockSpec((tm, hc), lambda i, kv: (i, 0)),
        scratch_shapes=[
            pltpu.VMEM((heads, tm, 1), jnp.float32),    # running max (per head)
            pltpu.VMEM((heads, tm, 1), jnp.float32),    # running denominator
            pltpu.VMEM((tm, hc), jnp.float32),          # lane-dense output accumulator
        ],
        compiler_params=pltpu.CompilerParams(
            dimension_semantics=("parallel", "arbitrary"),
            vmem_limit_bytes=_VMEM_LIMIT),
    )(q, k, v, xr, gamma, beta)


# --------------------------------------------------------------------------- #
# Full Encoder_GT_Layer forward
# --------------------------------------------------------------------------- #
def encoder_gt_layer(feat, adj, params, *, heads, out_channels, eps=1e-6,
                     gcn_block=512, attn_block_m=256, attn_block_k=512):
    n = feat.shape[0]
    # Tiles clamped to N; for production-sized graphs the defaults (512 / 256x512)
    # amortize per-step overhead and fill the 256-wide MXU. Keep the row grid >= 2
    # on v7x when possible so the "parallel" axis still shards across both TCs.
    tg = min(gcn_block, n)
    tma = min(attn_block_m, n)
    tka = min(attn_block_k, n)
    assert n % tg == 0 and n % tma == 0 and n % tka == 0, \
        "n_samples must be divisible by the (clamped) block sizes"

    # Cast the dominant HBM streams to bf16 ONCE.
    adj_bf16 = adj.astype(jnp.bfloat16)
    feat_bf16 = feat.astype(jnp.bfloat16)
    w1 = params["w1"].astype(jnp.bfloat16)
    w2 = params["w2"].astype(jnp.bfloat16)

    # Two GCN layers: precomputed x@W, k-accumulated adj@s, fused CELU.
    h1 = _gcn_layer(adj_bf16, feat_bf16, w1, tm=tg, tk=tg)   # (n, 2*gcn_out) bf16
    x = _gcn_layer(adj_bf16, h1, w2, tm=tg, tk=tg)           # (n, gcn_out)   bf16

    # Fused projection weights; 1/sqrt(C) folded into the query weight & bias so
    # the attention kernel never multiplies by the scale.
    hc = heads * out_channels
    inv_sqrt_c = 1.0 / math.sqrt(out_channels)
    w_fused = jnp.concatenate(
        [params["wq"] * inv_sqrt_c, params["wk"], params["wv"], params["wskip"]],
        axis=1).astype(jnp.bfloat16)
    b_fused = jnp.concatenate(
        [params["bq"] * inv_sqrt_c, params["bk"], params["bv"], params["bskip"]],
        axis=1)

    q, k, v, xr = _qkv_proj(x, w_fused, b_fused, hc=hc, tm=tma)

    return _attention(q, k, v, xr, params["gamma"], params["beta"],
                      heads=heads, c=out_channels, eps=eps, tm=tma, tk=tka)


# --------------------------------------------------------------------------- #
# Pure-JAX reference (same bf16-operand / f32-accumulation matmul precision)
# --------------------------------------------------------------------------- #
def _mm(a, b):
    return jnp.dot(a.astype(jnp.bfloat16), b.astype(jnp.bfloat16),
                   preferred_element_type=jnp.float32)


def _layernorm_ref(x, gamma, beta, eps):
    d = x.shape[-1]
    mean = jnp.mean(x, axis=-1, keepdims=True)
    cen = x - mean
    var = jnp.sum(cen * cen, axis=-1, keepdims=True) / (d - 1)
    return gamma * cen / (jnp.sqrt(var) + eps) + beta


def reference(feat, adj, params, *, heads, out_channels, eps=1e-6):
    H, C = heads, out_channels
    h1 = _celu(_mm(adj, _mm(feat, params["w1"])))
    x = _celu(_mm(adj, _mm(h1, params["w2"])))
    q = _mm(x, params["wq"]) + params["bq"]
    k = _mm(x, params["wk"]) + params["bk"]
    v = _mm(x, params["wv"]) + params["bv"]
    n = x.shape[0]
    qh = q.reshape(n, H, C).transpose(1, 0, 2)
    kh = k.reshape(n, H, C).transpose(1, 0, 2)
    vh = v.reshape(n, H, C).transpose(1, 0, 2)
    alpha = jnp.einsum("hnc,hmc->hnm", qh.astype(jnp.bfloat16), kh.astype(jnp.bfloat16),
                       preferred_element_type=jnp.float32) / math.sqrt(C)
    alpha = jax.nn.softmax(alpha, axis=-1)
    out = jnp.einsum("hnm,hmc->hnc", alpha.astype(jnp.bfloat16), vh.astype(jnp.bfloat16),
                     preferred_element_type=jnp.float32).transpose(1, 0, 2).reshape(n, H * C)
    out = out + (_mm(x, params["wskip"]) + params["bskip"])
    return _celu(_layernorm_ref(out, params["gamma"], params["beta"], eps))


if __name__ == "__main__":
    # Small shapes consistent with the module's forward.
    N = 256               # n_samples (graph nodes)
    GCN_IN = 16           # gcn_in_channels
    GCN_OUT = 32          # gcn_out_channels  (conv1 -> 64, conv2 -> 32)
    TFN_OUT = 64          # tfn_out_channels (per head)
    HEADS = 2
    HC = HEADS * TFN_OUT  # 128 -> lane-dense q/k/v/skip/output

    key = jax.random.PRNGKey(0)
    keys = jax.random.split(key, 12)

    feat = jax.random.normal(keys[0], (N, GCN_IN), dtype=jnp.float32)
    # Symmetric, row-normalized dense adjacency with self loops.
    a = jax.random.uniform(keys[1], (N, N), dtype=jnp.float32)
    a = (a + a.T) * 0.5 + jnp.eye(N, dtype=jnp.float32)
    adj = a / jnp.sum(a, axis=-1, keepdims=True)

    def init_w(k, shape, scale=0.2):
        return scale * jax.random.normal(k, shape, dtype=jnp.float32)

    params = {
        "w1": init_w(keys[2], (GCN_IN, 2 * GCN_OUT)),        # GraphConvolution 1, bias=False
        "w2": init_w(keys[3], (2 * GCN_OUT, GCN_OUT)),       # GraphConvolution 2, bias=False
        "wq": init_w(keys[4], (GCN_OUT, HC)),
        "bq": init_w(keys[5], (1, HC), 0.05),
        "wk": init_w(keys[6], (GCN_OUT, HC)),
        "bk": init_w(keys[7], (1, HC), 0.05),
        "wv": init_w(keys[8], (GCN_OUT, HC)),
        "bv": init_w(keys[9], (1, HC), 0.05),
        "wskip": init_w(keys[10], (GCN_OUT, HC)),
        "bskip": init_w(keys[11], (1, HC), 0.05),
        "gamma": jnp.ones((1, HC), dtype=jnp.float32),       # tfn_norm gamma
        "beta": jnp.zeros((1, HC), dtype=jnp.float32),       # tfn_norm beta
    }

    out = encoder_gt_layer(feat, adj, params, heads=HEADS, out_channels=TFN_OUT)
    out = jax.block_until_ready(out)

    ref = reference(feat, adj, params, heads=HEADS, out_channels=TFN_OUT)
    assert out.shape == (N, HC)
    # Tolerance accounts for bf16 MXU operands / bf16 intermediates, online softmax
    # and the approx reciprocal in the softmax denominator.
    assert jnp.allclose(out, ref, atol=2e-2, rtol=2e-2), \
        f"max abs err = {jnp.max(jnp.abs(out - ref))}"

    print("KERNEL_OK")
</pallas_src>

<mosaic_0001>
module attributes {stable_mosaic.version = 11 : i64} {
  func.func @_xw_kernel(%arg0: i32, %arg1: memref<256x16xbf16, #tpu.memory_space<vmem>>, %arg2: memref<16x64xbf16, #tpu.memory_space<vmem>>, %arg3: memref<256x64xbf16, #tpu.memory_space<vmem>>) attributes {dimension_semantics = [#tpu.dimension_semantics<parallel>], iteration_bounds = array<i64: 1>, scalar_prefetch = 0 : i64, scratch_operands = 0 : i64, tpu.core_type = #tpu.core_type<tc>, window_params = [{transform_indices = @transform_0, window_bounds = array<i64: 256, 16>}, {pipeline_mode = #tpu.pipeline_mode<synchronous>, transform_indices = @transform_1, window_bounds = array<i64: 16, 64>}, {transform_indices = @transform_2, window_bounds = array<i64: 256, 64>}]} {
    %c0 = arith.constant 0 : index
    %c0_0 = arith.constant 0 : index
    %0 = vector.load %arg1[%c0, %c0_0] : memref<256x16xbf16, #tpu.memory_space<vmem>>, vector<256x16xbf16>
    %c0_1 = arith.constant 0 : index
    %c0_2 = arith.constant 0 : index
    %1 = vector.load %arg2[%c0_1, %c0_2] : memref<16x64xbf16, #tpu.memory_space<vmem>>, vector<16x64xbf16>
    %cst = arith.constant dense<0.000000e+00> : vector<256x64xf32>
    %2 = tpu.matmul %0, %1, %cst {dimension_numbers = #tpu.dot_dimension_numbers<[1], [0], [0], [1], [0, 0, 1, 1], [], []>} : vector<256x16xbf16>, vector<16x64xbf16>, vector<256x64xf32> -> vector<256x64xf32>
    %3 = arith.truncf %2 : vector<256x64xf32> to vector<256x64xbf16>
    %c0_3 = arith.constant 0 : index
    %c0_4 = arith.constant 0 : index
    %4 = vector.load %arg3[%c0_3, %c0_4] : memref<256x64xbf16, #tpu.memory_space<vmem>>, vector<256x64xbf16>
    tpu.vector_store %arg3[%c0_3, %c0_4], %3 {strides = array<i32>} : memref<256x64xbf16, #tpu.memory_space<vmem>>, vector<256x64xbf16>,
    return
  }
  func.func @transform_0(%arg0: i32) -> (i32, i32) {
    %c0_i32 = arith.constant 0 : i32
    %c0_i32_0 = arith.constant 0 : i32
    return %arg0, %c0_i32 : i32, i32
  }
  func.func @transform_1(%arg0: i32) -> (i32, i32) {
    %c0_i32 = arith.constant 0 : i32
    %c0_i32_0 = arith.constant 0 : i32
    %c0_i32_1 = arith.constant 0 : i32
    return %c0_i32, %c0_i32_0 : i32, i32
  }
  func.func @transform_2(%arg0: i32) -> (i32, i32) {
    %c0_i32 = arith.constant 0 : i32
    %c0_i32_0 = arith.constant 0 : i32
    return %arg0, %c0_i32 : i32, i32
  }
}

</mosaic_0001>

<llo_original>
// kernel: tpu_custom_call.1
$region0: #{tpu_custom_call.1}
  #allocation0 [shape = 'u32[]', space=smem, size = 0x4, offset = 0x4, fixed_abs, tag = 'smem constant byte address 0x4 - core index']
  #allocation1 [shape = 'u32[72,128]{1,0:T(1,128)}', space=vmem, size = 0x9000, scoped, tag = 'internal scratch']
  %s0 = inlined_call_operand.vmem [shape: bf16[256,16], index: 0, kind: input, shape index: {}]
  %s1 = inlined_call_operand.vmem [shape: bf16[16,64], index: 1, kind: input, shape index: {}]
  %s2 = inlined_call_operand.vmem [shape: bf16[256,64], index: 2, kind: output, shape index: {}]
  %s3 = sld [smem:[#allocation0]]
  $region18: #{tpu_custom_call.1} parent=0
    _
  %s5 = ssub.s32 1, %s3
  %s6 = scalar_select 0, %s5, %s3
  // Predicated region
  $region2: #{tpu_custom_call.1} parent=0 // pred_check
    _
  $region3: #{tpu_custom_call.1} parent=0 // pred_check_branch
    %8 = sbr.rel (0) target = $region5
  $region4: #{tpu_custom_call.1} parent=0 // pred_region
    _
  $region5: #{tpu_custom_call.1} parent=0 // pred_fallthru
    _
  // Predicated region
  $region6: #{tpu_custom_call.1} parent=0 // pred_check
    _
  $region7: #{tpu_custom_call.1} parent=0 // pred_check_branch
    %10 = sbr.rel (0) target = $region9
  $region8: #{tpu_custom_call.1} parent=0 // pred_region
    _
  $region9: #{tpu_custom_call.1} parent=0 // pred_fallthru
    _
  %v12 = vld [vmem:[%s0] sm:$0xf]
  %v13 = vld [vmem:[%s0 + $0x4] sm:$0xf]
  %v14 = vld [vmem:[%s0 + $0x8] sm:$0xf]
  %v15 = vld [vmem:[%s0 + $0xc] sm:$0xf]
  %v16 = vld [vmem:[%s0 + $0x10] sm:$0xf]
  %v17 = vld [vmem:[%s0 + $0x14] sm:$0xf]
  %v18 = vld [vmem:[%s0 + $0x18] sm:$0xf]
  %v19 = vld [vmem:[%s0 + $0x1c] sm:$0xf]
  %v20 = vld [vmem:[%s0 + $0x20] sm:$0xf]
  %v21 = vld [vmem:[%s0 + $0x24] sm:$0xf]
  %v22 = vld [vmem:[%s0 + $0x28] sm:$0xf]
  %v23 = vld [vmem:[%s0 + $0x2c] sm:$0xf]
  %v24 = vld [vmem:[%s0 + $0x30] sm:$0xf]
  %v25 = vld [vmem:[%s0 + $0x34] sm:$0xf]
  %v26 = vld [vmem:[%s0 + $0x38] sm:$0xf]
  %v27 = vld [vmem:[%s0 + $0x3c] sm:$0xf]
  %v28 = vld [vmem:[%s0 + $0x40] sm:$0xf]
  %v29 = vld [vmem:[%s0 + $0x44] sm:$0xf]
  %v30 = vld [vmem:[%s0 + $0x48] sm:$0xf]
  %v31 = vld [vmem:[%s0 + $0x4c] sm:$0xf]
  %v32 = vld [vmem:[%s0 + $0x50] sm:$0xf]
  %v33 = vld [vmem:[%s0 + $0x54] sm:$0xf]
  %v34 = vld [vmem:[%s0 + $0x58] sm:$0xf]
  %v35 = vld [vmem:[%s0 + $0x5c] sm:$0xf]
  %v36 = vld [vmem:[%s0 + $0x60] sm:$0xf]
  %v37 = vld [vmem:[%s0 + $0x64] sm:$0xf]
  %v38 = vld [vmem:[%s0 + $0x68] sm:$0xf]
  %v39 = vld [vmem:[%s0 + $0x6c] sm:$0xf]
  %v40 = vld [vmem:[%s0 + $0x70] sm:$0xf]
  %v41 = vld [vmem:[%s0 + $0x74] sm:$0xf]
  %v42 = vld [vmem:[%s0 + $0x78] sm:$0xf]
  %v43 = vld [vmem:[%s0 + $0x7c] sm:$0xf]
  %v44 = vld [vmem:[%s1] sm:$0xf]
  %v45 = vld [vmem:[%s1 + $0x4] sm:$0xf]
  %v78 = vunpack.c.l.b16 %v12
  %v79 = vunpack.c.l.b16 %v13
  %v80 = vunpack.c.l.b16 %v14
  %v81 = vunpack.c.l.b16 %v15
  %v82 = vunpack.c.l.b16 %v16
  %v83 = vunpack.c.l.b16 %v17
  %v84 = vunpack.c.l.b16 %v18
  %v85 = vunpack.c.l.b16 %v19
  %v86 = vunpack.c.l.b16 %v20
  %v87 = vunpack.c.l.b16 %v21
  %v88 = vunpack.c.l.b16 %v22
  %v89 = vunpack.c.l.b16 %v23
  %v90 = vunpack.c.l.b16 %v24
  %v91 = vunpack.c.l.b16 %v25
  %v92 = vunpack.c.l.b16 %v26
  %v93 = vunpack.c.l.b16 %v27
  %v94 = vunpack.c.l.b16 %v28
  %v95 = vunpack.c.l.b16 %v29
  %v96 = vunpack.c.l.b16 %v30
  %v97 = vunpack.c.l.b16 %v31
  %v98 = vunpack.c.l.b16 %v32
  %v99 = vunpack.c.l.b16 %v33
  %v100 = vunpack.c.l.b16 %v34
  %v101 = vunpack.c.l.b16 %v35
  %v102 = vunpack.c.l.b16 %v36
  %v103 = vunpack.c.l.b16 %v37
  %v104 = vunpack.c.l.b16 %v38
  %v105 = vunpack.c.l.b16 %v39
  %v106 = vunpack.c.l.b16 %v40
  %v107 = vunpack.c.l.b16 %v41
  %v108 = vunpack.c.l.b16 %v42
  %v109 = vunpack.c.l.b16 %v43
  %v110 = vpack.c.b16 %v79, %v78
  %v111 = vpack.c.b16 %v81, %v80
  %v112 = vpack.c.b16 %v83, %v82
  %v113 = vpack.c.b16 %v85, %v84
  %v114 = vpack.c.b16 %v87, %v86
  %v115 = vpack.c.b16 %v89, %v88
  %v116 = vpack.c.b16 %v91, %v90
  %v117 = vpack.c.b16 %v93, %v92
  %v118 = vpack.c.b16 %v95, %v94
  %v119 = vpack.c.b16 %v97, %v96
  %v120 = vpack.c.b16 %v99, %v98
  %v121 = vpack.c.b16 %v101, %v100
  %v122 = vpack.c.b16 %v103, %v102
  %v123 = vpack.c.b16 %v105, %v104
  %v124 = vpack.c.b16 %v107, %v106
  %v125 = vpack.c.b16 %v109, %v108
  %v128 = vunpack.c.l.b16 %v44
  %v129 = vunpack.c.l.b16 %v45
  %v130 = vpack.c.b16 %v129, %v128
  %vm132 = vcmask 130048
  %v134 = vsel %vm132, %v110, 0
  %v137 = vsel %vm132, %v111, 0
  %v140 = vsel %vm132, %v112, 0
  %v143 = vsel %vm132, %v113, 0
  %v146 = vsel %vm132, %v114, 0
  %v149 = vsel %vm132, %v115, 0
  %v152 = vsel %vm132, %v116, 0
  %v155 = vsel %vm132, %v117, 0
  %v158 = vsel %vm132, %v118, 0
  %v161 = vsel %vm132, %v119, 0
  %v164 = vsel %vm132, %v120, 0
  %v167 = vsel %vm132, %v121, 0
  %v170 = vsel %vm132, %v122, 0
  %v173 = vsel %vm132, %v123, 0
  %v176 = vsel %vm132, %v124, 0
  %v179 = vsel %vm132, %v125, 0
  %181 = vmatpush.bf16.msra.mxu0 0
  %182 = vmatpush.bf16.msra.mxu0 0
  %183 = vmatpush.bf16.msra.mxu0 0
  %184 = vmatpush.bf16.msra.mxu0 0
  %185 = vmatpush.bf16.msra.mxu0 0
  %186 = vmatpush.bf16.msra.mxu0 0
  %187 = vmatpush.bf16.msra.mxu0 0
  %188 = vmatpush.bf16.msra.mxu0 %v130
  %189 = vmatmul.bf16.gmra.mxu0 %v134
  %v190 = vpop.f32.mrf.mxu0
  %v191 = vadd.f32 0.0, %v190
  %v192 = vpop.f32.mrf.mxu0
  %v193 = vadd.f32 0.0, %v192
  %194 = vmatmul.bf16.gmra.mxu0 %v137
  %v195 = vpop.f32.mrf.mxu0
  %v196 = vadd.f32 0.0, %v195
  %v197 = vpop.f32.mrf.mxu0
  %v198 = vadd.f32 0.0, %v197
  %199 = vmatmul.bf16.gmra.mxu0 %v140
  %v200 = vpop.f32.mrf.mxu0
  %v201 = vadd.f32 0.0, %v200
  %v202 = vpop.f32.mrf.mxu0
  %v203 = vadd.f32 0.0, %v202
  %204 = vmatmul.bf16.gmra.mxu0 %v143
  %v205 = vpop.f32.mrf.mxu0
  %v206 = vadd.f32 0.0, %v205
  %v207 = vpop.f32.mrf.mxu0
  %v208 = vadd.f32 0.0, %v207
  %209 = vmatmul.bf16.gmra.mxu0 %v146
  %v210 = vpop.f32.mrf.mxu0
  %v211 = vadd.f32 0.0, %v210
  %v212 = vpop.f32.mrf.mxu0
  %v213 = vadd.f32 0.0, %v212
  %214 = vmatmul.bf16.gmra.mxu0 %v149
  %v215 = vpop.f32.mrf.mxu0
  %v216 = vadd.f32 0.0, %v215
  %v217 = vpop.f32.mrf.mxu0
  %v218 = vadd.f32 0.0, %v217
  %219 = vmatmul.bf16.gmra.mxu0 %v152
  %v220 = vpop.f32.mrf.mxu0
  %v221 = vadd.f32 0.0, %v220
  %v222 = vpop.f32.mrf.mxu0
  %v223 = vadd.f32 0.0, %v222
  %224 = vmatmul.bf16.gmra.mxu0 %v155
  %v225 = vpop.f32.mrf.mxu0
  %v226 = vadd.f32 0.0, %v225
  %v227 = vpop.f32.mrf.mxu0
  %v228 = vadd.f32 0.0, %v227
  %229 = vmatmul.bf16.gmra.mxu0 %v158
  %v230 = vpop.f32.mrf.mxu0
  %v231 = vadd.f32 0.0, %v230
  %v232 = vpop.f32.mrf.mxu0
  %v233 = vadd.f32 0.0, %v232
  %234 = vmatmul.bf16.gmra.mxu0 %v161
  %v235 = vpop.f32.mrf.mxu0
  %v236 = vadd.f32 0.0, %v235
  %v237 = vpop.f32.mrf.mxu0
  %v238 = vadd.f32 0.0, %v237
  %239 = vmatmul.bf16.gmra.mxu0 %v164
  %v240 = vpop.f32.mrf.mxu0
  %v241 = vadd.f32 0.0, %v240
  %v242 = vpop.f32.mrf.mxu0
  %v243 = vadd.f32 0.0, %v242
  %244 = vmatmul.bf16.gmra.mxu0 %v167
  %v245 = vpop.f32.mrf.mxu0
  %v246 = vadd.f32 0.0, %v245
  %v247 = vpop.f32.mrf.mxu0
  %v248 = vadd.f32 0.0, %v247
  %249 = vmatmul.bf16.gmra.mxu0 %v170
  %v250 = vpop.f32.mrf.mxu0
  %v251 = vadd.f32 0.0, %v250
  %v252 = vpop.f32.mrf.mxu0
  %v253 = vadd.f32 0.0, %v252
  %254 = vmatmul.bf16.gmra.mxu0 %v173
  %v255 = vpop.f32.mrf.mxu0
  %v256 = vadd.f32 0.0, %v255
  %v257 = vpop.f32.mrf.mxu0
  %v258 = vadd.f32 0.0, %v257
  %259 = vmatmul.bf16.gmra.mxu0 %v176
  %v260 = vpop.f32.mrf.mxu0
  %v261 = vadd.f32 0.0, %v260
  %v262 = vpop.f32.mrf.mxu0
  %v263 = vadd.f32 0.0, %v262
  %264 = vmatmul.bf16.gmra.mxu0 %v179
  %v265 = vpop.f32.mrf.mxu0
  %v266 = vadd.f32 0.0, %v265
  %v267 = vpop.f32.mrf.mxu0
  %v268 = vadd.f32 0.0, %v267
  %269 = vdwg.mxu0
  %v270 = vpack.c.bf16 %v191, %v191
  %v271 = vpack.c.bf16 %v193, %v193
  %v272 = vpack.c.bf16 %v196, %v196
  %v273 = vpack.c.bf16 %v198, %v198
  %v274 = vpack.c.bf16 %v201, %v201
  %v275 = vpack.c.bf16 %v203, %v203
  %v276 = vpack.c.bf16 %v206, %v206
  %v277 = vpack.c.bf16 %v208, %v208
  %v278 = vpack.c.bf16 %v211, %v211
  %v279 = vpack.c.bf16 %v213, %v213
  %v280 = vpack.c.bf16 %v216, %v216
  %v281 = vpack.c.bf16 %v218, %v218
  %v282 = vpack.c.bf16 %v221, %v221
  %v283 = vpack.c.bf16 %v223, %v223
  %v284 = vpack.c.bf16 %v226, %v226
  %v285 = vpack.c.bf16 %v228, %v228
  %v286 = vpack.c.bf16 %v231, %v231
  %v287 = vpack.c.bf16 %v233, %v233
  %v288 = vpack.c.bf16 %v236, %v236
  %v289 = vpack.c.bf16 %v238, %v238
  %v290 = vpack.c.bf16 %v241, %v241
  %v291 = vpack.c.bf16 %v243, %v243
  %v292 = vpack.c.bf16 %v246, %v246
  %v293 = vpack.c.bf16 %v248, %v248
  %v294 = vpack.c.bf16 %v251, %v251
  %v295 = vpack.c.bf16 %v253, %v253
  %v296 = vpack.c.bf16 %v256, %v256
  %v297 = vpack.c.bf16 %v258, %v258
  %v298 = vpack.c.bf16 %v261, %v261
  %v299 = vpack.c.bf16 %v263, %v263
  %v300 = vpack.c.bf16 %v266, %v266
  %v301 = vpack.c.bf16 %v268, %v268
  %vm302 = vcmask 519168
  %303 = vst.msk [vmem:[%s2] sm:$0xf] %vm302, %v270
  %304 = vst.msk [vmem:[%s2 + $0x4] sm:$0xf] %vm302, %v271
  %305 = vst.msk [vmem:[%s2 + $0x8] sm:$0xf] %vm302, %v272
  %306 = vst.msk [vmem:[%s2 + $0xc] sm:$0xf] %vm302, %v273
  %307 = vst.msk [vmem:[%s2 + $0x10] sm:$0xf] %vm302, %v274
  %308 = vst.msk [vmem:[%s2 + $0x14] sm:$0xf] %vm302, %v275
  %309 = vst.msk [vmem:[%s2 + $0x18] sm:$0xf] %vm302, %v276
  %310 = vst.msk [vmem:[%s2 + $0x1c] sm:$0xf] %vm302, %v277
  %311 = vst.msk [vmem:[%s2 + $0x20] sm:$0xf] %vm302, %v278
  %312 = vst.msk [vmem:[%s2 + $0x24] sm:$0xf] %vm302, %v279
  %313 = vst.msk [vmem:[%s2 + $0x28] sm:$0xf] %vm302, %v280
  %314 = vst.msk [vmem:[%s2 + $0x2c] sm:$0xf] %vm302, %v281
  %315 = vst.msk [vmem:[%s2 + $0x30] sm:$0xf] %vm302, %v282
  %316 = vst.msk [vmem:[%s2 + $0x34] sm:$0xf] %vm302, %v283
  %317 = vst.msk [vmem:[%s2 + $0x38] sm:$0xf] %vm302, %v284
  %318 = vst.msk [vmem:[%s2 + $0x3c] sm:$0xf] %vm302, %v285
  %319 = vst.msk [vmem:[%s2 + $0x40] sm:$0xf] %vm302, %v286
  %320 = vst.msk [vmem:[%s2 + $0x44] sm:$0xf] %vm302, %v287
  %321 = vst.msk [vmem:[%s2 + $0x48] sm:$0xf] %vm302, %v288
  %322 = vst.msk [vmem:[%s2 + $0x4c] sm:$0xf] %vm302, %v289
  %323 = vst.msk [vmem:[%s2 + $0x50] sm:$0xf] %vm302, %v290
  %324 = vst.msk [vmem:[%s2 + $0x54] sm:$0xf] %vm302, %v291
  %325 = vst.msk [vmem:[%s2 + $0x58] sm:$0xf] %vm302, %v292
  %326 = vst.msk [vmem:[%s2 + $0x5c] sm:$0xf] %vm302, %v293
  %327 = vst.msk [vmem:[%s2 + $0x60] sm:$0xf] %vm302, %v294
  %328 = vst.msk [vmem:[%s2 + $0x64] sm:$0xf] %vm302, %v295
  %329 = vst.msk [vmem:[%s2 + $0x68] sm:$0xf] %vm302, %v296
  %330 = vst.msk [vmem:[%s2 + $0x6c] sm:$0xf] %vm302, %v297
  %331 = vst.msk [vmem:[%s2 + $0x70] sm:$0xf] %vm302, %v298
  %332 = vst.msk [vmem:[%s2 + $0x74] sm:$0xf] %vm302, %v299
  %333 = vst.msk [vmem:[%s2 + $0x78] sm:$0xf] %vm302, %v300
  %334 = vst.msk [vmem:[%s2 + $0x7c] sm:$0xf] %vm302, %v301
  // Predicated region
  $region10: #{tpu_custom_call.1} parent=0 // pred_check
    _
  $region11: #{tpu_custom_call.1} parent=0 // pred_check_branch
    %336 = sbr.rel (0) target = $region13
  $region12: #{tpu_custom_call.1} parent=0 // pred_region
    _
  $region13: #{tpu_custom_call.1} parent=0 // pred_fallthru
    _
  // Predicated region
  $region14: #{tpu_custom_call.1} parent=0 // pred_check
    _
  $region15: #{tpu_custom_call.1} parent=0 // pred_check_branch
    %338 = sbr.rel (0) target = $region17
  $region16: #{tpu_custom_call.1} parent=0 // pred_region
    _
  $region17: #{tpu_custom_call.1} parent=0 // pred_fallthru
    _

</llo_original>
